<compile_context>
chip_gen: v5e
topology: v5e:2x2
jax: 0.10.0
libtpu: 0.0.40
codegen_flags: <defaults>
</compile_context>

<pallas_src>
import functools

import jax
import jax.numpy as jnp
from jax.experimental import pallas as pl
from jax.experimental.pallas import tpu as pltpu


def _cnn_kernel(x_ref, cw_ref, cb_ref, fw_ref, fb_ref, out_ref, *, pooldim, num_task, batch):
    """Single program, everything resident in VMEM.

    x_ref : (L*B, F)         task-major rows (row = l*B + b)
    cw_ref: (P, F, OP)       conv weight split by pool slab: cw[k, f, j] = conv_w[j*P + k, f]
    cb_ref: (P, 1, OP)       matching conv bias layout
    fw_ref: (L, OP, C_pad)   fc weight per task, columns zero-padded to 128 lanes
    fb_ref: (1, C_pad)       fc bias (zero-padded)
    out_ref:(B, C_pad)       lane-dense output
    """
    x = x_ref[...]                                                    # (L*B, F)

    # Conv1d(k=1): one 16-row matmul per pool slab; MaxPool1d == elementwise max over slabs.
    # ReLU after the running max is exact (max is monotone, relu(max) == max(relu)).
    h = jnp.dot(x, cw_ref[0], preferred_element_type=jnp.float32) + cb_ref[0]
    for k in range(1, pooldim):                                       # small static unroll (P=4)
        hk = jnp.dot(x, cw_ref[k], preferred_element_type=jnp.float32) + cb_ref[k]
        h = jnp.maximum(h, hk)
    pooled = jnp.maximum(h, 0.0)                                      # (L*B, OP)

    # Dropout is identity at inference.
    # Final Linear: out[b, :] = sum_l pooled[l*B + b, :] @ fw[l]  (+ bias), accumulated in-register.
    acc = fb_ref[...] + jnp.dot(pooled[0:batch, :], fw_ref[0],
                                preferred_element_type=jnp.float32)   # (B, C_pad)
    for l in range(1, num_task):                                      # small static unroll (L=8)
        acc = acc + jnp.dot(pooled[l * batch:(l + 1) * batch, :], fw_ref[l],
                            preferred_element_type=jnp.float32)
    out_ref[...] = acc


def prepare_params(conv_w, conv_b, fc_w, fc_b, *, pooldim):
    """One-time parameter relayout (call at model init, NOT per forward).

    conv_w: (O, F)  -- Conv1d weight (O, F, 1) squeezed
    conv_b: (O,)
    fc_w  : (C, L*OP)
    fc_b  : (C,)
    """
    O, F = conv_w.shape
    assert O % pooldim == 0
    OP = O // pooldim
    C, LOP = fc_w.shape
    assert LOP % OP == 0
    L = LOP // OP
    C_pad = ((C + 127) // 128) * 128

    # cw[k, f, j] = conv_w[j*pooldim + k, f]   (channel j*P+k lives in pool slab k)
    cw = conv_w.reshape(OP, pooldim, F).transpose(1, 2, 0)            # (P, F, OP)
    # cb[k, 0, j] = conv_b[j*pooldim + k]
    cb = conv_b.reshape(OP, pooldim).T.reshape(pooldim, 1, OP)        # (P, 1, OP)
    # fw[l, j, c] = fc_w[c, l*OP + j], zero-padded over c to a lane-dense 128 multiple
    fw = fc_w.reshape(C, L, OP).transpose(1, 2, 0)                    # (L, OP, C)
    fw = jnp.pad(fw, ((0, 0), (0, 0), (0, C_pad - C)))                # (L, OP, C_pad)
    fb = jnp.pad(fc_b, (0, C_pad - C)).reshape(1, C_pad)              # (1, C_pad)
    return cw, cb, fw, fb


@functools.partial(jax.jit, static_argnames=("num_classes",))
def cnn_forward(x, cw, cb, fw, fb, *, num_classes):
    """x: (B, L, F) f32; prepared params from prepare_params(). Returns (B, num_classes)."""
    B, L_in, F = x.shape
    P, _, OP = cw.shape
    L, _, C_pad = fw.shape
    assert L_in == L

    # Task-major rows (row = l*B + b): makes every per-task FC slice a contiguous row block.
    # Tiny (2 KB) relayout done in the wrapper, outside the kernel.
    x_t = jnp.transpose(x, (1, 0, 2)).reshape(L * B, F)

    kernel = functools.partial(_cnn_kernel, pooldim=P, num_task=L, batch=B)

    grid_spec = pltpu.PrefetchScalarGridSpec(
        num_scalar_prefetch=0,
        grid=(1,),                                                    # single program
        in_specs=[
            pl.BlockSpec((L * B, F), lambda i: (0, 0)),
            pl.BlockSpec((P, F, OP), lambda i: (0, 0, 0)),
            pl.BlockSpec((P, 1, OP), lambda i: (0, 0, 0)),
            pl.BlockSpec((L, OP, C_pad), lambda i: (0, 0, 0)),
            pl.BlockSpec((1, C_pad), lambda i: (0, 0)),
        ],
        out_specs=pl.BlockSpec((B, C_pad), lambda i: (0, 0)),
    )

    out_pad = pl.pallas_call(
        kernel,
        out_shape=jax.ShapeDtypeStruct((B, C_pad), jnp.float32),
        grid_spec=grid_spec,
        compiler_params=pltpu.CompilerParams(dimension_semantics=("arbitrary",)),
    )(x_t, cw, cb, fw, fb)

    return out_pad[:, :num_classes]                                   # strip lane padding


def reference_forward(x, conv_w, conv_b, fc_w, fc_b, *, pooldim):
    """Pure-JAX reference mirroring the PyTorch forward (dropout = identity)."""
    B, L, F = x.shape
    O = conv_w.shape[0]
    h = jnp.einsum("blf,of->blo", x, conv_w) + conv_b                 # Conv1d(k=1)
    h = jnp.maximum(h, 0.0)                                           # ReLU
    pooled = h.reshape(B, L, O // pooldim, pooldim).max(axis=-1)      # MaxPool1d
    flat = pooled.reshape(B, -1)
    return flat @ fc_w.T + fc_b                                       # Linear


if __name__ == "__main__":
    # Small config consistent with the module's __init__.
    B = 2          # batch
    num_task = 8   # sequence length L
    n_feat = 32    # F
    outdim = 64    # O
    pooldim = 4    # P
    num_classes = 10

    key = jax.random.PRNGKey(0)
    kx, kcw, kcb, kfw, kfb = jax.random.split(key, 5)

    x = jax.random.normal(kx, (B, num_task, n_feat), dtype=jnp.float32)
    conv_w = 0.1 * jax.random.normal(kcw, (outdim, n_feat), dtype=jnp.float32)  # Conv1d (O,F,1) squeezed
    conv_b = 0.1 * jax.random.normal(kcb, (outdim,), dtype=jnp.float32)
    fc_in = outdim // pooldim * num_task
    fc_w = 0.1 * jax.random.normal(kfw, (num_classes, fc_in), dtype=jnp.float32)
    fc_b = 0.1 * jax.random.normal(kfb, (num_classes,), dtype=jnp.float32)

    # One-time parameter plumbing (model init), kept out of the per-call forward.
    cw, cb, fw, fb = jax.block_until_ready(prepare_params(conv_w, conv_b, fc_w, fc_b,
                                                          pooldim=pooldim))

    out = cnn_forward(x, cw, cb, fw, fb, num_classes=num_classes)
    out = jax.block_until_ready(out)

    ref = reference_forward(x, conv_w, conv_b, fc_w, fc_b, pooldim=pooldim)
    assert out.shape == (B, num_classes)
    assert jnp.allclose(out, ref, atol=1e-4, rtol=1e-4), (out, ref)

    print("KERNEL_OK")
</pallas_src>

<mosaic_0001>
module attributes {stable_mosaic.version = 11 : i64} {
  func.func @_cnn_kernel(%arg0: i32, %arg1: memref<16x32xf32, #tpu.memory_space<vmem>>, %arg2: memref<4x32x16xf32, #tpu.memory_space<vmem>>, %arg3: memref<4x1x16xf32, #tpu.memory_space<vmem>>, %arg4: memref<8x16x128xf32, #tpu.memory_space<vmem>>, %arg5: memref<1x128xf32, #tpu.memory_space<vmem>>, %arg6: memref<2x128xf32, #tpu.memory_space<vmem>>) attributes {dimension_semantics = [#tpu.dimension_semantics<arbitrary>], iteration_bounds = array<i64: 1>, scalar_prefetch = 0 : i64, scratch_operands = 0 : i64, tpu.core_type = #tpu.core_type<tc>, window_params = [{pipeline_mode = #tpu.pipeline_mode<synchronous>, transform_indices = @transform_0, window_bounds = array<i64: 16, 32>}, {pipeline_mode = #tpu.pipeline_mode<synchronous>, transform_indices = @transform_1, window_bounds = array<i64: 4, 32, 16>}, {pipeline_mode = #tpu.pipeline_mode<synchronous>, transform_indices = @transform_2, window_bounds = array<i64: 4, 1, 16>}, {pipeline_mode = #tpu.pipeline_mode<synchronous>, transform_indices = @transform_3, window_bounds = array<i64: 8, 16, 128>}, {pipeline_mode = #tpu.pipeline_mode<synchronous>, transform_indices = @transform_4, window_bounds = array<i64: 1, 128>}, {pipeline_mode = #tpu.pipeline_mode<synchronous>, transform_indices = @transform_5, window_bounds = array<i64: 2, 128>}]} {
    %c0 = arith.constant 0 : index
    %c0_0 = arith.constant 0 : index
    %0 = vector.load %arg1[%c0, %c0_0] : memref<16x32xf32, #tpu.memory_space<vmem>>, vector<16x32xf32>
    %c0_1 = arith.constant 0 : index
    %c0_2 = arith.constant 0 : index
    %c0_3 = arith.constant 0 : index
    %1 = vector.load %arg2[%c0_1, %c0_2, %c0_3] : memref<4x32x16xf32, #tpu.memory_space<vmem>>, vector<1x32x16xf32>
    %2 = vector.shape_cast %1 : vector<1x32x16xf32> to vector<32x16xf32>
    %cst = arith.constant dense<0.000000e+00> : vector<16x16xf32>
    %3 = tpu.matmul %0, %2, %cst {dimension_numbers = #tpu.dot_dimension_numbers<[1], [0], [0], [1], [0, 0, 1, 1], [], []>} : vector<16x32xf32>, vector<32x16xf32>, vector<16x16xf32> -> vector<16x16xf32>
    %c0_4 = arith.constant 0 : index
    %c0_5 = arith.constant 0 : index
    %c0_6 = arith.constant 0 : index
    %4 = vector.load %arg3[%c0_4, %c0_5, %c0_6] : memref<4x1x16xf32, #tpu.memory_space<vmem>>, vector<1x1x16xf32>
    %5 = vector.shape_cast %4 : vector<1x1x16xf32> to vector<1x16xf32>
    %6 = vector.broadcast %5 : vector<1x16xf32> to vector<16x16xf32>
    %7 = arith.addf %3, %6 : vector<16x16xf32>
    %c1 = arith.constant 1 : index
    %c0_7 = arith.constant 0 : index
    %c0_8 = arith.constant 0 : index
    %8 = vector.load %arg2[%c1, %c0_7, %c0_8] : memref<4x32x16xf32, #tpu.memory_space<vmem>>, vector<1x32x16xf32>
    %9 = vector.shape_cast %8 : vector<1x32x16xf32> to vector<32x16xf32>
    %cst_9 = arith.constant dense<0.000000e+00> : vector<16x16xf32>
    %10 = tpu.matmul %0, %9, %cst_9 {dimension_numbers = #tpu.dot_dimension_numbers<[1], [0], [0], [1], [0, 0, 1, 1], [], []>} : vector<16x32xf32>, vector<32x16xf32>, vector<16x16xf32> -> vector<16x16xf32>
    %c1_10 = arith.constant 1 : index
    %c0_11 = arith.constant 0 : index
    %c0_12 = arith.constant 0 : index
    %11 = vector.load %arg3[%c1_10, %c0_11, %c0_12] : memref<4x1x16xf32, #tpu.memory_space<vmem>>, vector<1x1x16xf32>
    %12 = vector.shape_cast %11 : vector<1x1x16xf32> to vector<1x16xf32>
    %13 = vector.broadcast %12 : vector<1x16xf32> to vector<16x16xf32>
    %14 = arith.addf %10, %13 : vector<16x16xf32>
    %15 = arith.maximumf %7, %14 : vector<16x16xf32>
    %c2 = arith.constant 2 : index
    %c0_13 = arith.constant 0 : index
    %c0_14 = arith.constant 0 : index
    %16 = vector.load %arg2[%c2, %c0_13, %c0_14] : memref<4x32x16xf32, #tpu.memory_space<vmem>>, vector<1x32x16xf32>
    %17 = vector.shape_cast %16 : vector<1x32x16xf32> to vector<32x16xf32>
    %cst_15 = arith.constant dense<0.000000e+00> : vector<16x16xf32>
    %18 = tpu.matmul %0, %17, %cst_15 {dimension_numbers = #tpu.dot_dimension_numbers<[1], [0], [0], [1], [0, 0, 1, 1], [], []>} : vector<16x32xf32>, vector<32x16xf32>, vector<16x16xf32> -> vector<16x16xf32>
    %c2_16 = arith.constant 2 : index
    %c0_17 = arith.constant 0 : index
    %c0_18 = arith.constant 0 : index
    %19 = vector.load %arg3[%c2_16, %c0_17, %c0_18] : memref<4x1x16xf32, #tpu.memory_space<vmem>>, vector<1x1x16xf32>
    %20 = vector.shape_cast %19 : vector<1x1x16xf32> to vector<1x16xf32>
    %21 = vector.broadcast %20 : vector<1x16xf32> to vector<16x16xf32>
    %22 = arith.addf %18, %21 : vector<16x16xf32>
    %23 = arith.maximumf %15, %22 : vector<16x16xf32>
    %c3 = arith.constant 3 : index
    %c0_19 = arith.constant 0 : index
    %c0_20 = arith.constant 0 : index
    %24 = vector.load %arg2[%c3, %c0_19, %c0_20] : memref<4x32x16xf32, #tpu.memory_space<vmem>>, vector<1x32x16xf32>
    %25 = vector.shape_cast %24 : vector<1x32x16xf32> to vector<32x16xf32>
    %cst_21 = arith.constant dense<0.000000e+00> : vector<16x16xf32>
    %26 = tpu.matmul %0, %25, %cst_21 {dimension_numbers = #tpu.dot_dimension_numbers<[1], [0], [0], [1], [0, 0, 1, 1], [], []>} : vector<16x32xf32>, vector<32x16xf32>, vector<16x16xf32> -> vector<16x16xf32>
    %c3_22 = arith.constant 3 : index
    %c0_23 = arith.constant 0 : index
    %c0_24 = arith.constant 0 : index
    %27 = vector.load %arg3[%c3_22, %c0_23, %c0_24] : memref<4x1x16xf32, #tpu.memory_space<vmem>>, vector<1x1x16xf32>
    %28 = vector.shape_cast %27 : vector<1x1x16xf32> to vector<1x16xf32>
    %29 = vector.broadcast %28 : vector<1x16xf32> to vector<16x16xf32>
    %30 = arith.addf %26, %29 : vector<16x16xf32>
    %31 = arith.maximumf %23, %30 : vector<16x16xf32>
    %cst_25 = arith.constant 0.000000e+00 : f32
    %32 = vector.broadcast %cst_25 : f32 to vector<16x16xf32>
    %33 = arith.maximumf %31, %32 : vector<16x16xf32>
    %c0_26 = arith.constant 0 : index
    %c0_27 = arith.constant 0 : index
    %34 = vector.load %arg5[%c0_26, %c0_27] : memref<1x128xf32, #tpu.memory_space<vmem>>, vector<1x128xf32>
    %35 = vector.extract_strided_slice %33 {offsets = [0, 0], sizes = [2, 16], strides = [1, 1]} : vector<16x16xf32> to vector<2x16xf32>
    %c0_28 = arith.constant 0 : index
    %c0_29 = arith.constant 0 : index
    %c0_30 = arith.constant 0 : index
    %36 = vector.load %arg4[%c0_28, %c0_29, %c0_30] : memref<8x16x128xf32, #tpu.memory_space<vmem>>, vector<1x16x128xf32>
    %37 = vector.shape_cast %36 : vector<1x16x128xf32> to vector<16x128xf32>
    %cst_31 = arith.constant dense<0.000000e+00> : vector<2x128xf32>
    %38 = tpu.matmul %35, %37, %cst_31 {dimension_numbers = #tpu.dot_dimension_numbers<[1], [0], [0], [1], [0, 0, 1, 1], [], []>} : vector<2x16xf32>, vector<16x128xf32>, vector<2x128xf32> -> vector<2x128xf32>
    %39 = vector.broadcast %34 : vector<1x128xf32> to vector<2x128xf32>
    %40 = arith.addf %39, %38 : vector<2x128xf32>
    %41 = vector.extract_strided_slice %33 {offsets = [2, 0], sizes = [2, 16], strides = [1, 1]} : vector<16x16xf32> to vector<2x16xf32>
    %c1_32 = arith.constant 1 : index
    %c0_33 = arith.constant 0 : index
    %c0_34 = arith.constant 0 : index
    %42 = vector.load %arg4[%c1_32, %c0_33, %c0_34] : memref<8x16x128xf32, #tpu.memory_space<vmem>>, vector<1x16x128xf32>
    %43 = vector.shape_cast %42 : vector<1x16x128xf32> to vector<16x128xf32>
    %cst_35 = arith.constant dense<0.000000e+00> : vector<2x128xf32>
    %44 = tpu.matmul %41, %43, %cst_35 {dimension_numbers = #tpu.dot_dimension_numbers<[1], [0], [0], [1], [0, 0, 1, 1], [], []>} : vector<2x16xf32>, vector<16x128xf32>, vector<2x128xf32> -> vector<2x128xf32>
    %45 = arith.addf %40, %44 : vector<2x128xf32>
    %46 = vector.extract_strided_slice %33 {offsets = [4, 0], sizes = [2, 16], strides = [1, 1]} : vector<16x16xf32> to vector<2x16xf32>
    %c2_36 = arith.constant 2 : index
    %c0_37 = arith.constant 0 : index
    %c0_38 = arith.constant 0 : index
    %47 = vector.load %arg4[%c2_36, %c0_37, %c0_38] : memref<8x16x128xf32, #tpu.memory_space<vmem>>, vector<1x16x128xf32>
    %48 = vector.shape_cast %47 : vector<1x16x128xf32> to vector<16x128xf32>
    %cst_39 = arith.constant dense<0.000000e+00> : vector<2x128xf32>
    %49 = tpu.matmul %46, %48, %cst_39 {dimension_numbers = #tpu.dot_dimension_numbers<[1], [0], [0], [1], [0, 0, 1, 1], [], []>} : vector<2x16xf32>, vector<16x128xf32>, vector<2x128xf32> -> vector<2x128xf32>
    %50 = arith.addf %45, %49 : vector<2x128xf32>
    %51 = vector.extract_strided_slice %33 {offsets = [6, 0], sizes = [2, 16], strides = [1, 1]} : vector<16x16xf32> to vector<2x16xf32>
    %c3_40 = arith.constant 3 : index
    %c0_41 = arith.constant 0 : index
    %c0_42 = arith.constant 0 : index
    %52 = vector.load %arg4[%c3_40, %c0_41, %c0_42] : memref<8x16x128xf32, #tpu.memory_space<vmem>>, vector<1x16x128xf32>
    %53 = vector.shape_cast %52 : vector<1x16x128xf32> to vector<16x128xf32>
    %cst_43 = arith.constant dense<0.000000e+00> : vector<2x128xf32>
    %54 = tpu.matmul %51, %53, %cst_43 {dimension_numbers = #tpu.dot_dimension_numbers<[1], [0], [0], [1], [0, 0, 1, 1], [], []>} : vector<2x16xf32>, vector<16x128xf32>, vector<2x128xf32> -> vector<2x128xf32>
    %55 = arith.addf %50, %54 : vector<2x128xf32>
    %56 = vector.extract_strided_slice %33 {offsets = [8, 0], sizes = [2, 16], strides = [1, 1]} : vector<16x16xf32> to vector<2x16xf32>
    %c4 = arith.constant 4 : index
    %c0_44 = arith.constant 0 : index
    %c0_45 = arith.constant 0 : index
    %57 = vector.load %arg4[%c4, %c0_44, %c0_45] : memref<8x16x128xf32, #tpu.memory_space<vmem>>, vector<1x16x128xf32>
    %58 = vector.shape_cast %57 : vector<1x16x128xf32> to vector<16x128xf32>
    %cst_46 = arith.constant dense<0.000000e+00> : vector<2x128xf32>
    %59 = tpu.matmul %56, %58, %cst_46 {dimension_numbers = #tpu.dot_dimension_numbers<[1], [0], [0], [1], [0, 0, 1, 1], [], []>} : vector<2x16xf32>, vector<16x128xf32>, vector<2x128xf32> -> vector<2x128xf32>
    %60 = arith.addf %55, %59 : vector<2x128xf32>
    %61 = vector.extract_strided_slice %33 {offsets = [10, 0], sizes = [2, 16], strides = [1, 1]} : vector<16x16xf32> to vector<2x16xf32>
    %c5 = arith.constant 5 : index
    %c0_47 = arith.constant 0 : index
    %c0_48 = arith.constant 0 : index
    %62 = vector.load %arg4[%c5, %c0_47, %c0_48] : memref<8x16x128xf32, #tpu.memory_space<vmem>>, vector<1x16x128xf32>
    %63 = vector.shape_cast %62 : vector<1x16x128xf32> to vector<16x128xf32>
    %cst_49 = arith.constant dense<0.000000e+00> : vector<2x128xf32>
    %64 = tpu.matmul %61, %63, %cst_49 {dimension_numbers = #tpu.dot_dimension_numbers<[1], [0], [0], [1], [0, 0, 1, 1], [], []>} : vector<2x16xf32>, vector<16x128xf32>, vector<2x128xf32> -> vector<2x128xf32>
    %65 = arith.addf %60, %64 : vector<2x128xf32>
    %66 = vector.extract_strided_slice %33 {offsets = [12, 0], sizes = [2, 16], strides = [1, 1]} : vector<16x16xf32> to vector<2x16xf32>
    %c6 = arith.constant 6 : index
    %c0_50 = arith.constant 0 : index
    %c0_51 = arith.constant 0 : index
    %67 = vector.load %arg4[%c6, %c0_50, %c0_51] : memref<8x16x128xf32, #tpu.memory_space<vmem>>, vector<1x16x128xf32>
    %68 = vector.shape_cast %67 : vector<1x16x128xf32> to vector<16x128xf32>
    %cst_52 = arith.constant dense<0.000000e+00> : vector<2x128xf32>
    %69 = tpu.matmul %66, %68, %cst_52 {dimension_numbers = #tpu.dot_dimension_numbers<[1], [0], [0], [1], [0, 0, 1, 1], [], []>} : vector<2x16xf32>, vector<16x128xf32>, vector<2x128xf32> -> vector<2x128xf32>
    %70 = arith.addf %65, %69 : vector<2x128xf32>
    %71 = vector.extract_strided_slice %33 {offsets = [14, 0], sizes = [2, 16], strides = [1, 1]} : vector<16x16xf32> to vector<2x16xf32>
    %c7 = arith.constant 7 : index
    %c0_53 = arith.constant 0 : index
    %c0_54 = arith.constant 0 : index
    %72 = vector.load %arg4[%c7, %c0_53, %c0_54] : memref<8x16x128xf32, #tpu.memory_space<vmem>>, vector<1x16x128xf32>
    %73 = vector.shape_cast %72 : vector<1x16x128xf32> to vector<16x128xf32>
    %cst_55 = arith.constant dense<0.000000e+00> : vector<2x128xf32>
    %74 = tpu.matmul %71, %73, %cst_55 {dimension_numbers = #tpu.dot_dimension_numbers<[1], [0], [0], [1], [0, 0, 1, 1], [], []>} : vector<2x16xf32>, vector<16x128xf32>, vector<2x128xf32> -> vector<2x128xf32>
    %75 = arith.addf %70, %74 : vector<2x128xf32>
    %c0_56 = arith.constant 0 : index
    %c0_57 = arith.constant 0 : index
    %76 = vector.load %arg6[%c0_56, %c0_57] : memref<2x128xf32, #tpu.memory_space<vmem>>, vector<2x128xf32>
    tpu.vector_store %arg6[%c0_56, %c0_57], %75 {strides = array<i32>} : memref<2x128xf32, #tpu.memory_space<vmem>>, vector<2x128xf32>,
    return
  }
  func.func @transform_0(%arg0: i32) -> (i32, i32) {
    %c0_i32 = arith.constant 0 : i32
    %c0_i32_0 = arith.constant 0 : i32
    %c0_i32_1 = arith.constant 0 : i32
    return %c0_i32, %c0_i32_0 : i32, i32
  }
  func.func @transform_1(%arg0: i32) -> (i32, i32, i32) {
    %c0_i32 = arith.constant 0 : i32
    %c0_i32_0 = arith.constant 0 : i32
    %c0_i32_1 = arith.constant 0 : i32
    %c0_i32_2 = arith.constant 0 : i32
    return %c0_i32, %c0_i32_0, %c0_i32_1 : i32, i32, i32
  }
  func.func @transform_2(%arg0: i32) -> (i32, i32, i32) {
    %c0_i32 = arith.constant 0 : i32
    %c0_i32_0 = arith.constant 0 : i32
    %c0_i32_1 = arith.constant 0 : i32
    %c0_i32_2 = arith.constant 0 : i32
    return %c0_i32, %c0_i32_0, %c0_i32_1 : i32, i32, i32
  }
  func.func @transform_3(%arg0: i32) -> (i32, i32, i32) {
    %c0_i32 = arith.constant 0 : i32
    %c0_i32_0 = arith.constant 0 : i32
    %c0_i32_1 = arith.constant 0 : i32
    %c0_i32_2 = arith.constant 0 : i32
    return %c0_i32, %c0_i32_0, %c0_i32_1 : i32, i32, i32
  }
  func.func @transform_4(%arg0: i32) -> (i32, i32) {
    %c0_i32 = arith.constant 0 : i32
    %c0_i32_0 = arith.constant 0 : i32
    %c0_i32_1 = arith.constant 0 : i32
    return %c0_i32, %c0_i32_0 : i32, i32
  }
  func.func @transform_5(%arg0: i32) -> (i32, i32) {
    %c0_i32 = arith.constant 0 : i32
    %c0_i32_0 = arith.constant 0 : i32
    %c0_i32_1 = arith.constant 0 : i32
    return %c0_i32, %c0_i32_0 : i32, i32
  }
}

</mosaic_0001>

<llo_original>
// kernel: cnn_forward.1
$region0: #{cnn_forward.1}
  #allocation0 [shape = 'u32[]', space=smem, size = 0x4, offset = 0x4, fixed_abs, tag = 'smem constant byte address 0x4 - core index']
  #allocation1 [shape = 'u32[72,128]{1,0:T(1,128)}', space=vmem, size = 0x9000, scoped, tag = 'internal scratch']
  %s0 = inlined_call_operand.vmem [shape: f32[16,32], index: 0, kind: input, shape index: {}]
  %s1 = inlined_call_operand.vmem [shape: f32[4,32,16], index: 1, kind: input, shape index: {}]
  %s2 = inlined_call_operand.vmem [shape: f32[4,1,16], index: 2, kind: input, shape index: {}]
  %s3 = inlined_call_operand.vmem [shape: f32[8,16,128], index: 3, kind: input, shape index: {}]
  %s4 = inlined_call_operand.vmem [shape: f32[1,128], index: 4, kind: input, shape index: {}]
  %s5 = inlined_call_operand.hbm [shape: f32[2,128], index: 5, kind: output, shape index: {}]
  %s6 = sld [smem:[#allocation0]]
  $region30: #{cnn_forward.1} parent=0
    _
  %s8 = ssub.s32 1, %s6
  %s9 = scalar_select 0, %s8, %s6
  $region1: #{cnn_forward.1} parent=0
    #allocation2 [shape = 'u8[1024]{0}', space=vmem, size = 0x400, scoped, tag = 'output window, operand 0, single buffered']
    #allocation3 [shape = 's32[1]{0}', space=sflag, size = 0x4, scoped, tag = 'scoped memory for cnn_forward.1']
    %10 = vsyncpa [#allocation3], 0
    // Predicated region
    $region2: #{cnn_forward.1} parent=1 // pred_check
      _
    $region3: #{cnn_forward.1} parent=1 // pred_check_branch
      %12 = sbr.rel (0) target = $region5
    $region4: #{cnn_forward.1} parent=1 // pred_region
      _
    $region5: #{cnn_forward.1} parent=1 // pred_fallthru
      _
    // Predicated region
    $region6: #{cnn_forward.1} parent=1 // pred_check
      _
    $region7: #{cnn_forward.1} parent=1 // pred_check_branch
      %14 = sbr.rel (0) target = $region9
    $region8: #{cnn_forward.1} parent=1 // pred_region
      _
    $region9: #{cnn_forward.1} parent=1 // pred_fallthru
      _
    // Predicated region
    $region10: #{cnn_forward.1} parent=1 // pred_check
      _
    $region11: #{cnn_forward.1} parent=1 // pred_check_branch
      %16 = sbr.rel (0) target = $region13
    $region12: #{cnn_forward.1} parent=1 // pred_region
      _
    $region13: #{cnn_forward.1} parent=1 // pred_fallthru
      _
    // Predicated region
    $region14: #{cnn_forward.1} parent=1 // pred_check
      _
    $region15: #{cnn_forward.1} parent=1 // pred_check_branch
      %18 = sbr.rel (0) target = $region17
    $region16: #{cnn_forward.1} parent=1 // pred_region
      _
    $region17: #{cnn_forward.1} parent=1 // pred_fallthru
      _
    // Predicated region
    $region18: #{cnn_forward.1} parent=1 // pred_check
      _
    $region19: #{cnn_forward.1} parent=1 // pred_check_branch
      %20 = sbr.rel (0) target = $region21
    $region20: #{cnn_forward.1} parent=1 // pred_region
      _
    $region21: #{cnn_forward.1} parent=1 // pred_fallthru
      _
    %v21 = vld [vmem:[%s0] sm:$0xff]
    %v22 = vld [vmem:[%s0 + $0x8] sm:$0xff]
    %v23 = vld [vmem:[%s1] sm:$0xff]
    %v24 = vld [vmem:[%s1 + $0x8] sm:$0xff]
    %v25 = vld [vmem:[%s1 + $0x10] sm:$0xff]
    %v26 = vld [vmem:[%s1 + $0x18] sm:$0xff]
    %v27 = vld [vmem:[%s2] sm:$0x1]
    %v29 = vperm.slane %v27, 0
    %vm31 = vcmask 261120
    %v33 = vsel %vm31, %v21, 0
    %v36 = vsel %vm31, %v22, 0
    %38 = vmatpush.msra.mxu0 0.0
    %39 = vmatpush.msra.mxu0 0.0
    %40 = vmatpush.msra.mxu0 0.0
    %41 = vmatpush.msra.mxu0 0.0
    %42 = vmatpush.msra.mxu0 0.0
    %43 = vmatpush.msra.mxu0 0.0
    %44 = vmatpush.msra.mxu0 0.0
    %45 = vmatpush.msra.mxu0 0.0
    %46 = vmatpush.msra.mxu0 0.0
    %47 = vmatpush.msra.mxu0 0.0
    %48 = vmatpush.msra.mxu0 0.0
    %49 = vmatpush.msra.mxu0 0.0
    %50 = vmatpush.msra.mxu0 %v26
    %51 = vmatpush.msra.mxu0 %v25
    %52 = vmatpush.msra.mxu0 %v24
    %53 = vmatpush.msra.mxu0 %v23
    %54 = vmatmul.f32.gmra.mxu0 %v33
    %v55 = vpop.f32.mrf.mxu0
    %v56 = vadd.f32 %v29, %v55
    %57 = vmatmul.f32.gmra.mxu0 %v36
    %v58 = vpop.f32.mrf.mxu0
    %v59 = vadd.f32 %v29, %v58
    %60 = vdwg.mxu0
    %s61 = scalar_lea.vmem %s1, 32
    %v62 = vld [vmem:[%s61] sm:$0xff]
    %v63 = vld [vmem:[%s61 + $0x8] sm:$0xff]
    %v64 = vld [vmem:[%s61 + $0x10] sm:$0xff]
    %v65 = vld [vmem:[%s61 + $0x18] sm:$0xff]
    %s66 = scalar_lea.vmem %s2, 1
    %v67 = vld [vmem:[%s66] sm:$0x1]
    %v69 = vperm.slane %v67, 0
    %71 = vmatpush.msra.mxu0 0.0
    %72 = vmatpush.msra.mxu0 0.0
    %73 = vmatpush.msra.mxu0 0.0
    %74 = vmatpush.msra.mxu0 0.0
    %75 = vmatpush.msra.mxu0 0.0
    %76 = vmatpush.msra.mxu0 0.0
    %77 = vmatpush.msra.mxu0 0.0
    %78 = vmatpush.msra.mxu0 0.0
    %79 = vmatpush.msra.mxu0 0.0
    %80 = vmatpush.msra.mxu0 0.0
    %81 = vmatpush.msra.mxu0 0.0
    %82 = vmatpush.msra.mxu0 0.0
    %83 = vmatpush.msra.mxu0 %v65
    %84 = vmatpush.msra.mxu0 %v64
    %85 = vmatpush.msra.mxu0 %v63
    %86 = vmatpush.msra.mxu0 %v62
    %87 = vmatmul.f32.gmra.mxu0 %v33
    %v88 = vpop.f32.mrf.mxu0
    %v89 = vadd.f32 %v69, %v88
    %90 = vmatmul.f32.gmra.mxu0 %v36
    %v91 = vpop.f32.mrf.mxu0
    %v92 = vadd.f32 %v69, %v91
    %93 = vdwg.mxu0
    %v94 = vmax.f32 %v56, %v89
    %v95 = vmax.f32 %v59, %v92
    %s96 = scalar_lea.vmem %s1, 64
    %v97 = vld [vmem:[%s96] sm:$0xff]
    %v98 = vld [vmem:[%s96 + $0x8] sm:$0xff]
    %v99 = vld [vmem:[%s96 + $0x10] sm:$0xff]
    %v100 = vld [vmem:[%s96 + $0x18] sm:$0xff]
    %s101 = scalar_lea.vmem %s2, 2
    %v102 = vld [vmem:[%s101] sm:$0x1]
    %v104 = vperm.slane %v102, 0
    %106 = vmatpush.msra.mxu0 0.0
    %107 = vmatpush.msra.mxu0 0.0
    %108 = vmatpush.msra.mxu0 0.0
    %109 = vmatpush.msra.mxu0 0.0
    %110 = vmatpush.msra.mxu0 0.0
    %111 = vmatpush.msra.mxu0 0.0
    %112 = vmatpush.msra.mxu0 0.0
    %113 = vmatpush.msra.mxu0 0.0
    %114 = vmatpush.msra.mxu0 0.0
    %115 = vmatpush.msra.mxu0 0.0
    %116 = vmatpush.msra.mxu0 0.0
    %117 = vmatpush.msra.mxu0 0.0
    %118 = vmatpush.msra.mxu0 %v100
    %119 = vmatpush.msra.mxu0 %v99
    %120 = vmatpush.msra.mxu0 %v98
    %121 = vmatpush.msra.mxu0 %v97
    %122 = vmatmul.f32.gmra.mxu0 %v33
    %v123 = vpop.f32.mrf.mxu0
    %v124 = vadd.f32 %v104, %v123
    %125 = vmatmul.f32.gmra.mxu0 %v36
    %v126 = vpop.f32.mrf.mxu0
    %v127 = vadd.f32 %v104, %v126
    %128 = vdwg.mxu0
    %v129 = vmax.f32 %v94, %v124
    %v130 = vmax.f32 %v95, %v127
    %s131 = scalar_lea.vmem %s1, 96
    %v132 = vld [vmem:[%s131] sm:$0xff]
    %v133 = vld [vmem:[%s131 + $0x8] sm:$0xff]
    %v134 = vld [vmem:[%s131 + $0x10] sm:$0xff]
    %v135 = vld [vmem:[%s131 + $0x18] sm:$0xff]
    %s136 = scalar_lea.vmem %s2, 3
    %v137 = vld [vmem:[%s136] sm:$0x1]
    %v139 = vperm.slane %v137, 0
    %141 = vmatpush.msra.mxu0 0.0
    %142 = vmatpush.msra.mxu0 0.0
    %143 = vmatpush.msra.mxu0 0.0
    %144 = vmatpush.msra.mxu0 0.0
    %145 = vmatpush.msra.mxu0 0.0
    %146 = vmatpush.msra.mxu0 0.0
    %147 = vmatpush.msra.mxu0 0.0
    %148 = vmatpush.msra.mxu0 0.0
    %149 = vmatpush.msra.mxu0 0.0
    %150 = vmatpush.msra.mxu0 0.0
    %151 = vmatpush.msra.mxu0 0.0
    %152 = vmatpush.msra.mxu0 0.0
    %153 = vmatpush.msra.mxu0 %v135
    %154 = vmatpush.msra.mxu0 %v134
    %155 = vmatpush.msra.mxu0 %v133
    %156 = vmatpush.msra.mxu0 %v132
    %157 = vmatmul.f32.gmra.mxu0 %v33
    %v158 = vpop.f32.mrf.mxu0
    %v159 = vadd.f32 %v139, %v158
    %160 = vmatmul.f32.gmra.mxu0 %v36
    %v161 = vpop.f32.mrf.mxu0
    %v162 = vadd.f32 %v139, %v161
    %163 = vdwg.mxu0
    %v164 = vmax.f32 %v129, %v159
    %v165 = vmax.f32 %v130, %v162
    %v166 = vmax.f32 %v164, 0.0
    %v167 = vmax.f32 %v165, 0.0
    %v168 = vld [vmem:[%s4] sm:$0x1]
    %v169 = vld [vmem:[%s3] sm:$0xff]
    %v170 = vld [vmem:[%s3 + $0x8] sm:$0xff]
    %vm171 = vcmask 130048
    %v173 = vsel %vm171, %v166, 0
    %175 = vmatpush.msra.mxu0 0.0
    %176 = vmatpush.msra.mxu0 0.0
    %177 = vmatpush.msra.mxu0 0.0
    %178 = vmatpush.msra.mxu0 0.0
    %179 = vmatpush.msra.mxu0 0.0
    %180 = vmatpush.msra.mxu0 0.0
    %181 = vmatpush.msra.mxu0 0.0
    %182 = vmatpush.msra.mxu0 0.0
    %183 = vmatpush.msra.mxu0 0.0
    %184 = vmatpush.msra.mxu0 0.0
    %185 = vmatpush.msra.mxu0 0.0
    %186 = vmatpush.msra.mxu0 0.0
    %187 = vmatpush.msra.mxu0 0.0
    %188 = vmatpush.msra.mxu0 0.0
    %189 = vmatpush.msra.mxu0 %v170
    %190 = vmatpush.msra.mxu0 %v169
    %191 = vmatmul.f32.gmra.mxu0 %v173
    %v192 = vpop.f32.mrf.mxu0
    %v193 = vadd.f32 0.0, %v192
    %194 = vdwg.mxu0
    %v196 = vperm.slane %v168, 0
    %v198 = vadd.f32 %v196, %v193
    %s199 = scalar_lea.vmem %s3, 16
    %v200 = vld [vmem:[%s199] sm:$0xff]
    %v201 = vld [vmem:[%s199 + $0x8] sm:$0xff]
    %v202 = vrot.slane %v166, 2
    %v203 = vsel %vm171, %v202, 0
    %205 = vmatpush.msra.mxu0 0.0
    %206 = vmatpush.msra.mxu0 0.0
    %207 = vmatpush.msra.mxu0 0.0
    %208 = vmatpush.msra.mxu0 0.0
    %209 = vmatpush.msra.mxu0 0.0
    %210 = vmatpush.msra.mxu0 0.0
    %211 = vmatpush.msra.mxu0 0.0
    %212 = vmatpush.msra.mxu0 0.0
    %213 = vmatpush.msra.mxu0 0.0
    %214 = vmatpush.msra.mxu0 0.0
    %215 = vmatpush.msra.mxu0 0.0
    %216 = vmatpush.msra.mxu0 0.0
    %217 = vmatpush.msra.mxu0 0.0
    %218 = vmatpush.msra.mxu0 0.0
    %219 = vmatpush.msra.mxu0 %v201
    %220 = vmatpush.msra.mxu0 %v200
    %221 = vmatmul.f32.gmra.mxu0 %v203
    %v222 = vpop.f32.mrf.mxu0
    %v223 = vadd.f32 0.0, %v222
    %224 = vdwg.mxu0
    %v225 = vadd.f32 %v198, %v223
    %s226 = scalar_lea.vmem %s3, 32
    %v227 = vld [vmem:[%s226] sm:$0xff]
    %v228 = vld [vmem:[%s226 + $0x8] sm:$0xff]
    %v229 = vrot.slane %v166, 4
    %v230 = vsel %vm171, %v229, 0
    %232 = vmatpush.msra.mxu0 0.0
    %233 = vmatpush.msra.mxu0 0.0
    %234 = vmatpush.msra.mxu0 0.0
    %235 = vmatpush.msra.mxu0 0.0
    %236 = vmatpush.msra.mxu0 0.0
    %237 = vmatpush.msra.mxu0 0.0
    %238 = vmatpush.msra.mxu0 0.0
    %239 = vmatpush.msra.mxu0 0.0
    %240 = vmatpush.msra.mxu0 0.0
    %241 = vmatpush.msra.mxu0 0.0
    %242 = vmatpush.msra.mxu0 0.0
    %243 = vmatpush.msra.mxu0 0.0
    %244 = vmatpush.msra.mxu0 0.0
    %245 = vmatpush.msra.mxu0 0.0
    %246 = vmatpush.msra.mxu0 %v228
    %247 = vmatpush.msra.mxu0 %v227
    %248 = vmatmul.f32.gmra.mxu0 %v230
    %v249 = vpop.f32.mrf.mxu0
    %v250 = vadd.f32 0.0, %v249
    %251 = vdwg.mxu0
    %v252 = vadd.f32 %v225, %v250
    %s253 = scalar_lea.vmem %s3, 48
    %v254 = vld [vmem:[%s253] sm:$0xff]
    %v255 = vld [vmem:[%s253 + $0x8] sm:$0xff]
    %v256 = vrot.slane %v166, 6
    %v257 = vsel %vm171, %v256, 0
    %259 = vmatpush.msra.mxu0 0.0
    %260 = vmatpush.msra.mxu0 0.0
    %261 = vmatpush.msra.mxu0 0.0
    %262 = vmatpush.msra.mxu0 0.0
    %263 = vmatpush.msra.mxu0 0.0
    %264 = vmatpush.msra.mxu0 0.0
    %265 = vmatpush.msra.mxu0 0.0
    %266 = vmatpush.msra.mxu0 0.0
    %267 = vmatpush.msra.mxu0 0.0
    %268 = vmatpush.msra.mxu0 0.0
    %269 = vmatpush.msra.mxu0 0.0
    %270 = vmatpush.msra.mxu0 0.0
    %271 = vmatpush.msra.mxu0 0.0
    %272 = vmatpush.msra.mxu0 0.0
    %273 = vmatpush.msra.mxu0 %v255
    %274 = vmatpush.msra.mxu0 %v254
    %275 = vmatmul.f32.gmra.mxu0 %v257
    %v276 = vpop.f32.mrf.mxu0
    %v277 = vadd.f32 0.0, %v276
    %278 = vdwg.mxu0
    %v279 = vadd.f32 %v252, %v277
    %s280 = scalar_lea.vmem %s3, 64
    %v281 = vld [vmem:[%s280] sm:$0xff]
    %v282 = vld [vmem:[%s280 + $0x8] sm:$0xff]
    %v284 = vsel %vm171, %v167, 0
    %286 = vmatpush.msra.mxu0 0.0
    %287 = vmatpush.msra.mxu0 0.0
    %288 = vmatpush.msra.mxu0 0.0
    %289 = vmatpush.msra.mxu0 0.0
    %290 = vmatpush.msra.mxu0 0.0
    %291 = vmatpush.msra.mxu0 0.0
    %292 = vmatpush.msra.mxu0 0.0
    %293 = vmatpush.msra.mxu0 0.0
    %294 = vmatpush.msra.mxu0 0.0
    %295 = vmatpush.msra.mxu0 0.0
    %296 = vmatpush.msra.mxu0 0.0
    %297 = vmatpush.msra.mxu0 0.0
    %298 = vmatpush.msra.mxu0 0.0
    %299 = vmatpush.msra.mxu0 0.0
    %300 = vmatpush.msra.mxu0 %v282
    %301 = vmatpush.msra.mxu0 %v281
    %302 = vmatmul.f32.gmra.mxu0 %v284
    %v303 = vpop.f32.mrf.mxu0
    %v304 = vadd.f32 0.0, %v303
    %305 = vdwg.mxu0
    %v306 = vadd.f32 %v279, %v304
    %s307 = scalar_lea.vmem %s3, 80
    %v308 = vld [vmem:[%s307] sm:$0xff]
    %v309 = vld [vmem:[%s307 + $0x8] sm:$0xff]
    %v310 = vrot.slane %v167, 2
    %v311 = vsel %vm171, %v310, 0
    %313 = vmatpush.msra.mxu0 0.0
    %314 = vmatpush.msra.mxu0 0.0
    %315 = vmatpush.msra.mxu0 0.0
    %316 = vmatpush.msra.mxu0 0.0
    %317 = vmatpush.msra.mxu0 0.0
    %318 = vmatpush.msra.mxu0 0.0
    %319 = vmatpush.msra.mxu0 0.0
    %320 = vmatpush.msra.mxu0 0.0
    %321 = vmatpush.msra.mxu0 0.0
    %322 = vmatpush.msra.mxu0 0.0
    %323 = vmatpush.msra.mxu0 0.0
    %324 = vmatpush.msra.mxu0 0.0
    %325 = vmatpush.msra.mxu0 0.0
    %326 = vmatpush.msra.mxu0 0.0
    %327 = vmatpush.msra.mxu0 %v309
    %328 = vmatpush.msra.mxu0 %v308
    %329 = vmatmul.f32.gmra.mxu0 %v311
    %v330 = vpop.f32.mrf.mxu0
    %v331 = vadd.f32 0.0, %v330
    %332 = vdwg.mxu0
    %v333 = vadd.f32 %v306, %v331
    %s334 = scalar_lea.vmem %s3, 96
    %v335 = vld [vmem:[%s334] sm:$0xff]
    %v336 = vld [vmem:[%s334 + $0x8] sm:$0xff]
    %v337 = vrot.slane %v167, 4
    %v338 = vsel %vm171, %v337, 0
    %340 = vmatpush.msra.mxu0 0.0
    %341 = vmatpush.msra.mxu0 0.0
    %342 = vmatpush.msra.mxu0 0.0
    %343 = vmatpush.msra.mxu0 0.0
    %344 = vmatpush.msra.mxu0 0.0
    %345 = vmatpush.msra.mxu0 0.0
    %346 = vmatpush.msra.mxu0 0.0
    %347 = vmatpush.msra.mxu0 0.0
    %348 = vmatpush.msra.mxu0 0.0
    %349 = vmatpush.msra.mxu0 0.0
    %350 = vmatpush.msra.mxu0 0.0
    %351 = vmatpush.msra.mxu0 0.0
    %352 = vmatpush.msra.mxu0 0.0
    %353 = vmatpush.msra.mxu0 0.0
    %354 = vmatpush.msra.mxu0 %v336
    %355 = vmatpush.msra.mxu0 %v335
    %356 = vmatmul.f32.gmra.mxu0 %v338
    %v357 = vpop.f32.mrf.mxu0
    %v358 = vadd.f32 0.0, %v357
    %359 = vdwg.mxu0
    %v360 = vadd.f32 %v333, %v358
    %s361 = scalar_lea.vmem %s3, 112
    %v362 = vld [vmem:[%s361] sm:$0xff]
    %v363 = vld [vmem:[%s361 + $0x8] sm:$0xff]
    %v364 = vrot.slane %v167, 6
    %v365 = vsel %vm171, %v364, 0
    %367 = vmatpush.msra.mxu0 0.0
    %368 = vmatpush.msra.mxu0 0.0
    %369 = vmatpush.msra.mxu0 0.0
    %370 = vmatpush.msra.mxu0 0.0
    %371 = vmatpush.msra.mxu0 0.0
    %372 = vmatpush.msra.mxu0 0.0
    %373 = vmatpush.msra.mxu0 0.0
    %374 = vmatpush.msra.mxu0 0.0
    %375 = vmatpush.msra.mxu0 0.0
    %376 = vmatpush.msra.mxu0 0.0
    %377 = vmatpush.msra.mxu0 0.0
    %378 = vmatpush.msra.mxu0 0.0
    %379 = vmatpush.msra.mxu0 0.0
    %380 = vmatpush.msra.mxu0 0.0
    %381 = vmatpush.msra.mxu0 %v363
    %382 = vmatpush.msra.mxu0 %v362
    %383 = vmatmul.f32.gmra.mxu0 %v365
    %v384 = vpop.f32.mrf.mxu0
    %v385 = vadd.f32 0.0, %v384
    %386 = vdwg.mxu0
    %v387 = vadd.f32 %v360, %v385
    %388 = vst [vmem:[#allocation2] sm:$0x3] %v387
    // Predicated region
    $region22: #{cnn_forward.1} parent=1 // pred_check
      _
    $region23: #{cnn_forward.1} parent=1 // pred_check_branch
      %390 = sbr.rel (0) target = $region25
    $region24: #{cnn_forward.1} parent=1 // pred_region
      %392 = vsyncadd [#allocation3], 0
      %s394 = sshll.u32 [#allocation2], 4
      %s395 = int_to_ptr.vmem [resolvable:$true] %s394
      %s396 = sshll.u32 %s5, 4
      %s397 = int_to_ptr.hbm [resolvable:$true] %s396
      %399 = dma.vmem_to_hbm [thread:$0]  %s395, 32, %s397, [#allocation3]
    $region25: #{cnn_forward.1} parent=1 // pred_fallthru
      _
    // Predicated region
    $region26: #{cnn_forward.1} parent=1 // pred_check
      _
    $region27: #{cnn_forward.1} parent=1 // pred_check_branch
      %401 = sbr.rel (0) target = $region29
    $region28: #{cnn_forward.1} parent=1 // pred_region
      %403 = dma.done [#allocation3], 32
    $region29: #{cnn_forward.1} parent=1 // pred_fallthru
      _
    %404 = vsyncpa [#allocation3], 1

</llo_original>
